<compile_context>
chip_gen: v7x
topology: tpu7x:2x2x1
jax: 0.10.0
libtpu: 0.0.40
codegen_flags: <defaults>
</compile_context>

<pallas_src>
import functools

import numpy as np
import jax
import jax.numpy as jnp
from jax.experimental import pallas as pl
from jax.experimental.pallas import tpu as pltpu

EPS = 1e-5  # PyTorch BatchNorm1d default eps


# ----------------------------- Pallas kernel ------------------------------- #

def _fused_forward_kernel(*refs, cfgs, n_arrays):
    """All encoder/decoder layers fused, lane-packed layout.

    refs = (x_ref, arr_ref_0..arr_ref_{n_arrays-1}, o_ref)
      x_ref   : VMEM (C0, N*L0) f32  -- channels on sublanes, batch*nodes on lanes
      arr_ref : VMEM f32 matrices    -- conv weights (Cout, Cin) and
                                        kron(I_N, sampling) matrices (N*Lin, N*Lout)
      o_ref   : VMEM (C_last, N*L_last) f32
    """
    x_ref = refs[0]
    arr_refs = refs[1:1 + n_arrays]
    o_ref = refs[1 + n_arrays]

    h = x_ref[...]                                   # (C, N*L)

    for cfg in cfgs:
        # --- Conv1d(k=1, bias=False): channel mix --------------------------
        w = arr_refs[cfg['w_idx']][...]              # (Cout, Cin)
        if cfg['cin'] == 1:
            h = w * h                                # (Cout,1)*(1,NL) VPU broadcast
        else:
            h = jnp.dot(w, h, preferred_element_type=jnp.float32)   # tiny MXU op

        # --- Graph down/up-sampling: one un-batched 2-D matmul -------------
        if cfg['m_idx'] is not None:
            m = arr_refs[cfg['m_idx']][...]          # kron(I_N, M): (N*Lin, N*Lout)
            h = jnp.dot(h, m, preferred_element_type=jnp.float32)

        # --- Tanh -----------------------------------------------------------
        if cfg['act']:
            h = jnp.tanh(h)

        # --- BatchNorm1d (training-mode batch stats, identity affine) ------
        # Per-channel stats == per-row lane reduce over the packed (batch,
        # node) axis: no reshapes, matches the joint axis=(0,2) reduction.
        if cfg['bn']:
            mean = jnp.mean(h, axis=1, keepdims=True)
            centered = h - mean                      # hoisted once
            var = jnp.mean(centered * centered, axis=1, keepdims=True)
            h = centered * jax.lax.rsqrt(var + EPS)

    o_ref[...] = h.astype(o_ref.dtype)


# ------------------------ parameter / matrix setup ------------------------- #

def _normalize_A(A, gamma):
    An = np.diag(1.0 / A.sum(axis=0)) @ A
    return gamma * np.eye(A.shape[0]) + (1.0 - gamma) * An


def down_node_matrix(D, A, gamma):
    """GraphDownsampling (WEI): out[n,c,:] = x[n,c,:] @ D_T @ A_norm."""
    Deg_inv = np.diag(1.0 / D.sum(axis=1))
    D_T = (Deg_inv @ D).T                            # (parent=Lin, child=Lout)
    return (D_T @ _normalize_A(A, gamma)).astype(np.float32)


def up_node_matrix(U, A, gamma):
    """GraphUpsampling (WEI): out[n,c,:] = x[n,c,:] @ U^T @ A_norm."""
    return (U.T @ _normalize_A(A, gamma)).astype(np.float32)


def prepare_params(layer_defs, n_batch):
    """Host-side (numpy) prep.

    Conv weights stay (Cout, Cin); sampling matrices are kron'd with I_N so
    the lane-packed (C, N*L) activation is sampled with one 2-D matmul.
    """
    cfgs, arrays = [], []
    eye_n = np.eye(n_batch, dtype=np.float32)
    for ld in layer_defs:
        w = np.asarray(ld['w'], np.float32)          # (Cout, Cin)
        cout, cin = w.shape
        w_idx = len(arrays)
        arrays.append(jnp.asarray(w))
        if ld['m'] is not None:
            m = np.asarray(ld['m'], np.float32)      # (Lin, Lout), per graph
            m_idx = len(arrays)
            arrays.append(jnp.asarray(np.kron(eye_n, m)))   # (N*Lin, N*Lout)
            l_out = int(m.shape[1])
        else:
            m_idx, l_out = None, None
        cfgs.append(dict(cin=int(cin), cout=int(cout), w_idx=w_idx,
                         m_idx=m_idx, l_out=l_out,
                         act=bool(ld['act']), bn=bool(ld['bn'])))
    return tuple(cfgs), arrays


# -------------------------------- wrapper ----------------------------------- #

def graph_encoder_decoder_forward(x_ncl, params):
    """x_ncl: (N, C, L) float32 as in PyTorch. params from prepare_params()."""
    cfgs, arrays = params
    n, c0, l0 = x_ncl.shape
    c, l = c0, l0
    for cfg in cfgs:                                 # derive output shape
        c = cfg['cout']
        if cfg['l_out'] is not None:
            l = cfg['l_out']

    # Lane-packed 2-D layout: channels on sublanes, (batch, nodes) on lanes.
    x2d = jnp.transpose(x_ncl, (1, 0, 2)).reshape(c0, n * l0)

    vmem = pl.BlockSpec(memory_space=pltpu.MemorySpace.VMEM)
    kernel = functools.partial(_fused_forward_kernel, cfgs=cfgs,
                               n_arrays=len(arrays))

    out2d = pl.pallas_call(
        kernel,
        out_shape=jax.ShapeDtypeStruct((c, n * l), jnp.float32),
        in_specs=[vmem] * (1 + len(arrays)),
        out_specs=vmem,
        compiler_params=pltpu.CompilerParams(
            vmem_limit_bytes=32 * 1024 * 1024),      # working set is only KBs
    )(x2d, *arrays)

    return jnp.transpose(out2d.reshape(c, n, l), (1, 0, 2))


def reference_forward(x_ncl, layer_defs):
    """Pure-JAX reference in the PyTorch op order (conv -> sample -> tanh -> bn)."""
    x = jnp.asarray(x_ncl, jnp.float32)
    for ld in layer_defs:
        w = jnp.asarray(ld['w'], jnp.float32)                      # (Cout, Cin)
        y = jnp.sum(w[None, :, :, None] * x[:, None, :, :], axis=2)  # exact f32
        if ld['m'] is not None:
            m = jnp.asarray(ld['m'], jnp.float32)                  # (Lin, Lout)
            n_, c_, l_ = y.shape
            y = jnp.dot(y.reshape(n_ * c_, l_), m).reshape(n_, c_, m.shape[1])
        if ld['act']:
            y = jnp.tanh(y)
        if ld['bn']:
            mean = jnp.mean(y, axis=(0, 2), keepdims=True)
            var = jnp.mean((y - mean) ** 2, axis=(0, 2), keepdims=True)
            y = (y - mean) * jax.lax.rsqrt(var + EPS)
        x = y
    return x


# --------------------------------- main ------------------------------------ #

if __name__ == "__main__":
    key = jax.random.PRNGKey(0)
    keys = jax.random.split(key, 16)
    gamma = 0.5

    # Architecture (mirrors GraphEncoderDecoder.__init__ args):
    features_enc, nodes_enc = [1, 4, 8], [32, 16, 8]
    features_dec, nodes_dec = [8, 4, 4], [8, 16, 32]
    features_conv_dec = [4, 4, 1]
    N = 2

    # Cluster matrices D (child aggregates 2 parents) and U (parent feeds 2 children).
    def make_D(child, parent):
        D = np.zeros((child, parent), np.float64)
        for i in range(child):
            D[i, 2 * i] = 1.0
            D[i, 2 * i + 1] = 1.0
        return D

    def make_U(child, parent):
        U = np.zeros((child, parent), np.float64)
        for i in range(child):
            U[i, i // 2] = 1.0
        return U

    Ds = [make_D(16, 32), make_D(8, 16)]
    Us = [make_U(16, 8), make_U(32, 16)]

    # Symmetric adjacency matrices with positive degrees.
    def make_A(k, n):
        R = np.array(jax.random.uniform(k, (n, n)), np.float64)
        return R + R.T

    As_enc = [None, make_A(keys[0], 16), make_A(keys[1], 8)]   # index 0 unused
    As_dec = [None, make_A(keys[2], 16), make_A(keys[3], 32)]  # index 0 unused

    # Conv1d(k=1, bias=False) weights, shape (Cout, Cin) (kernel dim squeezed).
    def conv_w(k, cout, cin):
        return np.asarray(jax.random.normal(k, (cout, cin), jnp.float32)) / np.sqrt(cin)

    W = [
        conv_w(keys[4], 4, 1),   # enc l=0
        conv_w(keys[5], 8, 4),   # enc l=1
        conv_w(keys[6], 4, 8),   # dec l=0
        conv_w(keys[7], 4, 4),   # dec l=1
        conv_w(keys[8], 4, 4),   # conv-dec l=0
        conv_w(keys[9], 1, 4),   # conv-dec l=1
    ]

    M = [
        down_node_matrix(Ds[0], As_enc[1], gamma),  # 32 -> 16
        down_node_matrix(Ds[1], As_enc[2], gamma),  # 16 -> 8
        up_node_matrix(Us[0], As_dec[1], gamma),    # 8  -> 16
        up_node_matrix(Us[1], As_dec[2], gamma),    # 16 -> 32
    ]

    # Layer schedule exactly mirroring GraphEncoderDecoder.build_network:
    #   encoder: conv -> down -> tanh -> bn   (x2)
    #   decoder: conv -> up   -> tanh -> bn   (x2, features_conv_dec nonempty)
    #   conv-dec: conv -> tanh -> bn ; conv -> last_tanh (no bn)
    layer_defs = [
        dict(w=W[0], m=M[0], act=True, bn=True),
        dict(w=W[1], m=M[1], act=True, bn=True),
        dict(w=W[2], m=M[2], act=True, bn=True),
        dict(w=W[3], m=M[3], act=True, bn=True),
        dict(w=W[4], m=None, act=True, bn=True),
        dict(w=W[5], m=None, act=True, bn=False),   # last_act_fn = Tanh, no BN
    ]

    params = prepare_params(layer_defs, N)

    # Input in PyTorch NCL layout: (batch, features_enc[0], nodes_enc[0]).
    x = jax.random.normal(keys[10], (N, features_enc[0], nodes_enc[0]), jnp.float32)

    out = graph_encoder_decoder_forward(x, params)
    out = jax.block_until_ready(out)

    ref = reference_forward(x, layer_defs)
    np.testing.assert_allclose(np.array(out), np.array(ref), rtol=5e-4, atol=1e-4)
    assert out.shape == (N, features_conv_dec[-1], nodes_dec[-1])
    assert bool(jnp.all(jnp.isfinite(out)))

    print("KERNEL_OK")
</pallas_src>

<mosaic_0001>
module attributes {stable_mosaic.version = 11 : i64} {
  func.func @_fused_forward_kernel(%arg0: memref<1x64xf32, #tpu.memory_space<vmem>>, %arg1: memref<4x1xf32, #tpu.memory_space<vmem>>, %arg2: memref<64x32xf32, #tpu.memory_space<vmem>>, %arg3: memref<8x4xf32, #tpu.memory_space<vmem>>, %arg4: memref<32x16xf32, #tpu.memory_space<vmem>>, %arg5: memref<4x8xf32, #tpu.memory_space<vmem>>, %arg6: memref<16x32xf32, #tpu.memory_space<vmem>>, %arg7: memref<4x4xf32, #tpu.memory_space<vmem>>, %arg8: memref<32x64xf32, #tpu.memory_space<vmem>>, %arg9: memref<4x4xf32, #tpu.memory_space<vmem>>, %arg10: memref<1x4xf32, #tpu.memory_space<vmem>>, %arg11: memref<1x64xf32, #tpu.memory_space<vmem>>) attributes {dimension_semantics = [], scalar_prefetch = 0 : i64, scratch_operands = 0 : i64, tpu.core_type = #tpu.core_type<tc>} {
    %c0 = arith.constant 0 : index
    %c0_0 = arith.constant 0 : index
    %0 = vector.load %arg0[%c0, %c0_0] : memref<1x64xf32, #tpu.memory_space<vmem>>, vector<1x64xf32>
    %c0_1 = arith.constant 0 : index
    %c0_2 = arith.constant 0 : index
    %1 = vector.load %arg1[%c0_1, %c0_2] : memref<4x1xf32, #tpu.memory_space<vmem>>, vector<4x1xf32>
    %2 = vector.broadcast %1 : vector<4x1xf32> to vector<4x64xf32>
    %3 = vector.broadcast %0 : vector<1x64xf32> to vector<4x64xf32>
    %4 = arith.mulf %2, %3 : vector<4x64xf32>
    %c0_3 = arith.constant 0 : index
    %c0_4 = arith.constant 0 : index
    %5 = vector.load %arg2[%c0_3, %c0_4] : memref<64x32xf32, #tpu.memory_space<vmem>>, vector<64x32xf32>
    %cst = arith.constant dense<0.000000e+00> : vector<4x32xf32>
    %6 = tpu.matmul %4, %5, %cst {dimension_numbers = #tpu.dot_dimension_numbers<[1], [0], [0], [1], [0, 0, 1, 1], [], []>} : vector<4x64xf32>, vector<64x32xf32>, vector<4x32xf32> -> vector<4x32xf32>
    %7 = math.tanh %6 : vector<4x32xf32>
    %cst_5 = arith.constant dense<0.000000e+00> : vector<4xf32>
    %8 = vector.multi_reduction <add>, %7, %cst_5 [1] : vector<4x32xf32> to vector<4xf32>
    %9 = vector.shape_cast %8 : vector<4xf32> to vector<4x1xf32>
    %cst_6 = arith.constant 3.200000e+01 : f32
    %10 = vector.broadcast %cst_6 : f32 to vector<4x1xf32>
    %11 = arith.divf %9, %10 : vector<4x1xf32>
    %12 = vector.broadcast %11 : vector<4x1xf32> to vector<4x32xf32>
    %13 = arith.subf %7, %12 : vector<4x32xf32>
    %14 = arith.mulf %13, %13 : vector<4x32xf32>
    %cst_7 = arith.constant dense<0.000000e+00> : vector<4xf32>
    %15 = vector.multi_reduction <add>, %14, %cst_7 [1] : vector<4x32xf32> to vector<4xf32>
    %16 = vector.shape_cast %15 : vector<4xf32> to vector<4x1xf32>
    %cst_8 = arith.constant 3.200000e+01 : f32
    %17 = vector.broadcast %cst_8 : f32 to vector<4x1xf32>
    %18 = arith.divf %16, %17 : vector<4x1xf32>
    %cst_9 = arith.constant 9.99999974E-6 : f32
    %19 = vector.broadcast %cst_9 : f32 to vector<4x1xf32>
    %20 = arith.addf %18, %19 : vector<4x1xf32>
    %21 = math.rsqrt %20 : vector<4x1xf32>
    %22 = vector.broadcast %21 : vector<4x1xf32> to vector<4x32xf32>
    %23 = arith.mulf %13, %22 : vector<4x32xf32>
    %c0_10 = arith.constant 0 : index
    %c0_11 = arith.constant 0 : index
    %24 = vector.load %arg3[%c0_10, %c0_11] : memref<8x4xf32, #tpu.memory_space<vmem>>, vector<8x4xf32>
    %cst_12 = arith.constant dense<0.000000e+00> : vector<8x32xf32>
    %25 = tpu.matmul %24, %23, %cst_12 {dimension_numbers = #tpu.dot_dimension_numbers<[1], [0], [0], [1], [0, 0, 1, 1], [], []>} : vector<8x4xf32>, vector<4x32xf32>, vector<8x32xf32> -> vector<8x32xf32>
    %c0_13 = arith.constant 0 : index
    %c0_14 = arith.constant 0 : index
    %26 = vector.load %arg4[%c0_13, %c0_14] : memref<32x16xf32, #tpu.memory_space<vmem>>, vector<32x16xf32>
    %cst_15 = arith.constant dense<0.000000e+00> : vector<8x16xf32>
    %27 = tpu.matmul %25, %26, %cst_15 {dimension_numbers = #tpu.dot_dimension_numbers<[1], [0], [0], [1], [0, 0, 1, 1], [], []>} : vector<8x32xf32>, vector<32x16xf32>, vector<8x16xf32> -> vector<8x16xf32>
    %28 = math.tanh %27 : vector<8x16xf32>
    %cst_16 = arith.constant dense<0.000000e+00> : vector<8xf32>
    %29 = vector.multi_reduction <add>, %28, %cst_16 [1] : vector<8x16xf32> to vector<8xf32>
    %30 = vector.shape_cast %29 : vector<8xf32> to vector<8x1xf32>
    %cst_17 = arith.constant 1.600000e+01 : f32
    %31 = vector.broadcast %cst_17 : f32 to vector<8x1xf32>
    %32 = arith.divf %30, %31 : vector<8x1xf32>
    %33 = vector.broadcast %32 : vector<8x1xf32> to vector<8x16xf32>
    %34 = arith.subf %28, %33 : vector<8x16xf32>
    %35 = arith.mulf %34, %34 : vector<8x16xf32>
    %cst_18 = arith.constant dense<0.000000e+00> : vector<8xf32>
    %36 = vector.multi_reduction <add>, %35, %cst_18 [1] : vector<8x16xf32> to vector<8xf32>
    %37 = vector.shape_cast %36 : vector<8xf32> to vector<8x1xf32>
    %cst_19 = arith.constant 1.600000e+01 : f32
    %38 = vector.broadcast %cst_19 : f32 to vector<8x1xf32>
    %39 = arith.divf %37, %38 : vector<8x1xf32>
    %cst_20 = arith.constant 9.99999974E-6 : f32
    %40 = vector.broadcast %cst_20 : f32 to vector<8x1xf32>
    %41 = arith.addf %39, %40 : vector<8x1xf32>
    %42 = math.rsqrt %41 : vector<8x1xf32>
    %43 = vector.broadcast %42 : vector<8x1xf32> to vector<8x16xf32>
    %44 = arith.mulf %34, %43 : vector<8x16xf32>
    %c0_21 = arith.constant 0 : index
    %c0_22 = arith.constant 0 : index
    %45 = vector.load %arg5[%c0_21, %c0_22] : memref<4x8xf32, #tpu.memory_space<vmem>>, vector<4x8xf32>
    %cst_23 = arith.constant dense<0.000000e+00> : vector<4x16xf32>
    %46 = tpu.matmul %45, %44, %cst_23 {dimension_numbers = #tpu.dot_dimension_numbers<[1], [0], [0], [1], [0, 0, 1, 1], [], []>} : vector<4x8xf32>, vector<8x16xf32>, vector<4x16xf32> -> vector<4x16xf32>
    %c0_24 = arith.constant 0 : index
    %c0_25 = arith.constant 0 : index
    %47 = vector.load %arg6[%c0_24, %c0_25] : memref<16x32xf32, #tpu.memory_space<vmem>>, vector<16x32xf32>
    %cst_26 = arith.constant dense<0.000000e+00> : vector<4x32xf32>
    %48 = tpu.matmul %46, %47, %cst_26 {dimension_numbers = #tpu.dot_dimension_numbers<[1], [0], [0], [1], [0, 0, 1, 1], [], []>} : vector<4x16xf32>, vector<16x32xf32>, vector<4x32xf32> -> vector<4x32xf32>
    %49 = math.tanh %48 : vector<4x32xf32>
    %cst_27 = arith.constant dense<0.000000e+00> : vector<4xf32>
    %50 = vector.multi_reduction <add>, %49, %cst_27 [1] : vector<4x32xf32> to vector<4xf32>
    %51 = vector.shape_cast %50 : vector<4xf32> to vector<4x1xf32>
    %cst_28 = arith.constant 3.200000e+01 : f32
    %52 = vector.broadcast %cst_28 : f32 to vector<4x1xf32>
    %53 = arith.divf %51, %52 : vector<4x1xf32>
    %54 = vector.broadcast %53 : vector<4x1xf32> to vector<4x32xf32>
    %55 = arith.subf %49, %54 : vector<4x32xf32>
    %56 = arith.mulf %55, %55 : vector<4x32xf32>
    %cst_29 = arith.constant dense<0.000000e+00> : vector<4xf32>
    %57 = vector.multi_reduction <add>, %56, %cst_29 [1] : vector<4x32xf32> to vector<4xf32>
    %58 = vector.shape_cast %57 : vector<4xf32> to vector<4x1xf32>
    %cst_30 = arith.constant 3.200000e+01 : f32
    %59 = vector.broadcast %cst_30 : f32 to vector<4x1xf32>
    %60 = arith.divf %58, %59 : vector<4x1xf32>
    %cst_31 = arith.constant 9.99999974E-6 : f32
    %61 = vector.broadcast %cst_31 : f32 to vector<4x1xf32>
    %62 = arith.addf %60, %61 : vector<4x1xf32>
    %63 = math.rsqrt %62 : vector<4x1xf32>
    %64 = vector.broadcast %63 : vector<4x1xf32> to vector<4x32xf32>
    %65 = arith.mulf %55, %64 : vector<4x32xf32>
    %c0_32 = arith.constant 0 : index
    %c0_33 = arith.constant 0 : index
    %66 = vector.load %arg7[%c0_32, %c0_33] : memref<4x4xf32, #tpu.memory_space<vmem>>, vector<4x4xf32>
    %cst_34 = arith.constant dense<0.000000e+00> : vector<4x32xf32>
    %67 = tpu.matmul %66, %65, %cst_34 {dimension_numbers = #tpu.dot_dimension_numbers<[1], [0], [0], [1], [0, 0, 1, 1], [], []>} : vector<4x4xf32>, vector<4x32xf32>, vector<4x32xf32> -> vector<4x32xf32>
    %c0_35 = arith.constant 0 : index
    %c0_36 = arith.constant 0 : index
    %68 = vector.load %arg8[%c0_35, %c0_36] : memref<32x64xf32, #tpu.memory_space<vmem>>, vector<32x64xf32>
    %cst_37 = arith.constant dense<0.000000e+00> : vector<4x64xf32>
    %69 = tpu.matmul %67, %68, %cst_37 {dimension_numbers = #tpu.dot_dimension_numbers<[1], [0], [0], [1], [0, 0, 1, 1], [], []>} : vector<4x32xf32>, vector<32x64xf32>, vector<4x64xf32> -> vector<4x64xf32>
    %70 = math.tanh %69 : vector<4x64xf32>
    %cst_38 = arith.constant dense<0.000000e+00> : vector<4xf32>
    %71 = vector.multi_reduction <add>, %70, %cst_38 [1] : vector<4x64xf32> to vector<4xf32>
    %72 = vector.shape_cast %71 : vector<4xf32> to vector<4x1xf32>
    %cst_39 = arith.constant 6.400000e+01 : f32
    %73 = vector.broadcast %cst_39 : f32 to vector<4x1xf32>
    %74 = arith.divf %72, %73 : vector<4x1xf32>
    %75 = vector.broadcast %74 : vector<4x1xf32> to vector<4x64xf32>
    %76 = arith.subf %70, %75 : vector<4x64xf32>
    %77 = arith.mulf %76, %76 : vector<4x64xf32>
    %cst_40 = arith.constant dense<0.000000e+00> : vector<4xf32>
    %78 = vector.multi_reduction <add>, %77, %cst_40 [1] : vector<4x64xf32> to vector<4xf32>
    %79 = vector.shape_cast %78 : vector<4xf32> to vector<4x1xf32>
    %cst_41 = arith.constant 6.400000e+01 : f32
    %80 = vector.broadcast %cst_41 : f32 to vector<4x1xf32>
    %81 = arith.divf %79, %80 : vector<4x1xf32>
    %cst_42 = arith.constant 9.99999974E-6 : f32
    %82 = vector.broadcast %cst_42 : f32 to vector<4x1xf32>
    %83 = arith.addf %81, %82 : vector<4x1xf32>
    %84 = math.rsqrt %83 : vector<4x1xf32>
    %85 = vector.broadcast %84 : vector<4x1xf32> to vector<4x64xf32>
    %86 = arith.mulf %76, %85 : vector<4x64xf32>
    %c0_43 = arith.constant 0 : index
    %c0_44 = arith.constant 0 : index
    %87 = vector.load %arg9[%c0_43, %c0_44] : memref<4x4xf32, #tpu.memory_space<vmem>>, vector<4x4xf32>
    %cst_45 = arith.constant dense<0.000000e+00> : vector<4x64xf32>
    %88 = tpu.matmul %87, %86, %cst_45 {dimension_numbers = #tpu.dot_dimension_numbers<[1], [0], [0], [1], [0, 0, 1, 1], [], []>} : vector<4x4xf32>, vector<4x64xf32>, vector<4x64xf32> -> vector<4x64xf32>
    %89 = math.tanh %88 : vector<4x64xf32>
    %cst_46 = arith.constant dense<0.000000e+00> : vector<4xf32>
    %90 = vector.multi_reduction <add>, %89, %cst_46 [1] : vector<4x64xf32> to vector<4xf32>
    %91 = vector.shape_cast %90 : vector<4xf32> to vector<4x1xf32>
    %cst_47 = arith.constant 6.400000e+01 : f32
    %92 = vector.broadcast %cst_47 : f32 to vector<4x1xf32>
    %93 = arith.divf %91, %92 : vector<4x1xf32>
    %94 = vector.broadcast %93 : vector<4x1xf32> to vector<4x64xf32>
    %95 = arith.subf %89, %94 : vector<4x64xf32>
    %96 = arith.mulf %95, %95 : vector<4x64xf32>
    %cst_48 = arith.constant dense<0.000000e+00> : vector<4xf32>
    %97 = vector.multi_reduction <add>, %96, %cst_48 [1] : vector<4x64xf32> to vector<4xf32>
    %98 = vector.shape_cast %97 : vector<4xf32> to vector<4x1xf32>
    %cst_49 = arith.constant 6.400000e+01 : f32
    %99 = vector.broadcast %cst_49 : f32 to vector<4x1xf32>
    %100 = arith.divf %98, %99 : vector<4x1xf32>
    %cst_50 = arith.constant 9.99999974E-6 : f32
    %101 = vector.broadcast %cst_50 : f32 to vector<4x1xf32>
    %102 = arith.addf %100, %101 : vector<4x1xf32>
    %103 = math.rsqrt %102 : vector<4x1xf32>
    %104 = vector.broadcast %103 : vector<4x1xf32> to vector<4x64xf32>
    %105 = arith.mulf %95, %104 : vector<4x64xf32>
    %c0_51 = arith.constant 0 : index
    %c0_52 = arith.constant 0 : index
    %106 = vector.load %arg10[%c0_51, %c0_52] : memref<1x4xf32, #tpu.memory_space<vmem>>, vector<1x4xf32>
    %cst_53 = arith.constant dense<0.000000e+00> : vector<1x64xf32>
    %107 = tpu.matmul %106, %105, %cst_53 {dimension_numbers = #tpu.dot_dimension_numbers<[1], [0], [0], [1], [0, 0, 1, 1], [], []>} : vector<1x4xf32>, vector<4x64xf32>, vector<1x64xf32> -> vector<1x64xf32>
    %108 = math.tanh %107 : vector<1x64xf32>
    %c0_54 = arith.constant 0 : index
    %c0_55 = arith.constant 0 : index
    %109 = vector.load %arg11[%c0_54, %c0_55] : memref<1x64xf32, #tpu.memory_space<vmem>>, vector<1x64xf32>
    tpu.vector_store %arg11[%c0_54, %c0_55], %108 {strides = array<i32>} : memref<1x64xf32, #tpu.memory_space<vmem>>, vector<1x64xf32>,
    return
  }
}

</mosaic_0001>

<llo_original>
// kernel: tpu_custom_call.1
$region0: #{tpu_custom_call.1}
  #allocation0 [shape = 'u32[]', space=smem, size = 0x4, offset = 0x4, fixed_abs, tag = 'smem constant byte address 0x4 - core index']
  #allocation1 [shape = 'u32[144,128]{1,0:T(1,128)}', space=vmem, size = 0x12000, scoped, tag = 'internal scratch']
  %s0 = inlined_call_operand.vmem [shape: f32[1,64], index: 0, kind: input, shape index: {}]
  %s1 = inlined_call_operand.vmem [shape: f32[4,1], index: 1, kind: input, shape index: {}]
  %s2 = inlined_call_operand.vmem [shape: f32[64,32], index: 2, kind: input, shape index: {}]
  %s3 = inlined_call_operand.vmem [shape: f32[8,4], index: 3, kind: input, shape index: {}]
  %s4 = inlined_call_operand.vmem [shape: f32[32,16], index: 4, kind: input, shape index: {}]
  %s5 = inlined_call_operand.vmem [shape: f32[4,8], index: 5, kind: input, shape index: {}]
  %s6 = inlined_call_operand.vmem [shape: f32[16,32], index: 6, kind: input, shape index: {}]
  %s7 = inlined_call_operand.vmem [shape: f32[4,4], index: 7, kind: input, shape index: {}]
  %s8 = inlined_call_operand.vmem [shape: f32[32,64], index: 8, kind: input, shape index: {}]
  %s9 = inlined_call_operand.vmem [shape: f32[4,4], index: 9, kind: input, shape index: {}]
  %s10 = inlined_call_operand.vmem [shape: f32[1,4], index: 10, kind: input, shape index: {}]
  %s11 = inlined_call_operand.hbm [shape: f32[1,64], index: 11, kind: output, shape index: {}]
  %s12 = sld [smem:[#allocation0]]
  $region54: #{tpu_custom_call.1} parent=0
    _
  %s14 = ssub.s32 1, %s12
  %s15 = scalar_select 0, %s14, %s12
  $region1: #{tpu_custom_call.1} parent=0
    #allocation2 [shape = 'u8[512]{0}', space=vmem, size = 0x400, scoped, tag = 'output window, operand 0, single buffered']
    #allocation3 [shape = 's32[1]{0}', space=sflag, size = 0x4, scoped, tag = 'scoped memory for tpu_custom_call.1']
    %16 = vsyncpa [#allocation3], 0
    // Predicated region
    $region2: #{tpu_custom_call.1} parent=1 // pred_check
      _
    $region3: #{tpu_custom_call.1} parent=1 // pred_check_branch
      %18 = sbr.rel (0) target = $region5
    $region4: #{tpu_custom_call.1} parent=1 // pred_region
      _
    $region5: #{tpu_custom_call.1} parent=1 // pred_fallthru
      _
    // Predicated region
    $region6: #{tpu_custom_call.1} parent=1 // pred_check
      _
    $region7: #{tpu_custom_call.1} parent=1 // pred_check_branch
      %20 = sbr.rel (0) target = $region9
    $region8: #{tpu_custom_call.1} parent=1 // pred_region
      _
    $region9: #{tpu_custom_call.1} parent=1 // pred_fallthru
      _
    // Predicated region
    $region10: #{tpu_custom_call.1} parent=1 // pred_check
      _
    $region11: #{tpu_custom_call.1} parent=1 // pred_check_branch
      %22 = sbr.rel (0) target = $region13
    $region12: #{tpu_custom_call.1} parent=1 // pred_region
      _
    $region13: #{tpu_custom_call.1} parent=1 // pred_fallthru
      _
    // Predicated region
    $region14: #{tpu_custom_call.1} parent=1 // pred_check
      _
    $region15: #{tpu_custom_call.1} parent=1 // pred_check_branch
      %24 = sbr.rel (0) target = $region17
    $region16: #{tpu_custom_call.1} parent=1 // pred_region
      _
    $region17: #{tpu_custom_call.1} parent=1 // pred_fallthru
      _
    // Predicated region
    $region18: #{tpu_custom_call.1} parent=1 // pred_check
      _
    $region19: #{tpu_custom_call.1} parent=1 // pred_check_branch
      %26 = sbr.rel (0) target = $region21
    $region20: #{tpu_custom_call.1} parent=1 // pred_region
      _
    $region21: #{tpu_custom_call.1} parent=1 // pred_fallthru
      _
    // Predicated region
    $region22: #{tpu_custom_call.1} parent=1 // pred_check
      _
    $region23: #{tpu_custom_call.1} parent=1 // pred_check_branch
      %28 = sbr.rel (0) target = $region25
    $region24: #{tpu_custom_call.1} parent=1 // pred_region
      _
    $region25: #{tpu_custom_call.1} parent=1 // pred_fallthru
      _
    // Predicated region
    $region26: #{tpu_custom_call.1} parent=1 // pred_check
      _
    $region27: #{tpu_custom_call.1} parent=1 // pred_check_branch
      %30 = sbr.rel (0) target = $region29
    $region28: #{tpu_custom_call.1} parent=1 // pred_region
      _
    $region29: #{tpu_custom_call.1} parent=1 // pred_fallthru
      _
    // Predicated region
    $region30: #{tpu_custom_call.1} parent=1 // pred_check
      _
    $region31: #{tpu_custom_call.1} parent=1 // pred_check_branch
      %32 = sbr.rel (0) target = $region33
    $region32: #{tpu_custom_call.1} parent=1 // pred_region
      _
    $region33: #{tpu_custom_call.1} parent=1 // pred_fallthru
      _
    // Predicated region
    $region34: #{tpu_custom_call.1} parent=1 // pred_check
      _
    $region35: #{tpu_custom_call.1} parent=1 // pred_check_branch
      %34 = sbr.rel (0) target = $region37
    $region36: #{tpu_custom_call.1} parent=1 // pred_region
      _
    $region37: #{tpu_custom_call.1} parent=1 // pred_fallthru
      _
    // Predicated region
    $region38: #{tpu_custom_call.1} parent=1 // pred_check
      _
    $region39: #{tpu_custom_call.1} parent=1 // pred_check_branch
      %36 = sbr.rel (0) target = $region41
    $region40: #{tpu_custom_call.1} parent=1 // pred_region
      _
    $region41: #{tpu_custom_call.1} parent=1 // pred_fallthru
      _
    // Predicated region
    $region42: #{tpu_custom_call.1} parent=1 // pred_check
      _
    $region43: #{tpu_custom_call.1} parent=1 // pred_check_branch
      %38 = sbr.rel (0) target = $region45
    $region44: #{tpu_custom_call.1} parent=1 // pred_region
      _
    $region45: #{tpu_custom_call.1} parent=1 // pred_fallthru
      _
    %v39 = vld [vmem:[%s0] sm:$0x1]
    %v40 = vld [vmem:[%s1] sm:$0xf]
    %42 = vset.pattern.permute.xlu0 0
    %43 = vperm.xlu0 %42, %v40
    %v44 = vpop.permute.xlu0 %43
    %v47 = vlaneseq
    %v48 = vshrl.u32 %v47, 7
    %v49 = vsub.s32 0, %v48
    %v50 = vrot.slane %v39, %v49
    %v52 = vmul.f32 %v44, %v50
    %v53 = vld [vmem:[%s2] sm:$0xff]
    %v54 = vld [vmem:[%s2 + $0x8] sm:$0xff]
    %v55 = vld [vmem:[%s2 + $0x10] sm:$0xff]
    %v56 = vld [vmem:[%s2 + $0x18] sm:$0xff]
    %v57 = vld [vmem:[%s2 + $0x20] sm:$0xff]
    %v58 = vld [vmem:[%s2 + $0x28] sm:$0xff]
    %v59 = vld [vmem:[%s2 + $0x30] sm:$0xff]
    %v60 = vld [vmem:[%s2 + $0x38] sm:$0xff]
    %vm61 = vcmask 523264
    %v63 = vsel %vm61, %v52, 0
    %65 = vmatprep.subr.mxu0 0.0
    %66 = vmatpush1.msra.mxu0 %v53
    %67 = vmatprep.subr.mxu0 0.0
    %68 = vmatpush1.msra.mxu0 %v54
    %69 = vmatprep.subr.mxu0 0.0
    %70 = vmatpush1.msra.mxu0 %v55
    %71 = vmatprep.subr.mxu0 0.0
    %72 = vmatpush1.msra.mxu0 %v56
    %73 = vmatprep.subr.mxu0 0.0
    %74 = vmatpush1.msra.mxu0 %v57
    %75 = vmatprep.subr.mxu0 0.0
    %76 = vmatpush1.msra.mxu0 %v58
    %77 = vmatprep.subr.mxu0 0.0
    %78 = vmatpush1.msra.mxu0 %v59
    %79 = vmatprep.subr.mxu0 0.0
    %80 = vmatpush1.msra.mxu0 %v60
    %81 = vmatprep.subr.mxu0 0.0
    %82 = vmatpush1.msra.mxu0 0.0
    %83 = vmatprep.subr.mxu0 0.0
    %84 = vmatpush1.msra.mxu0 0.0
    %85 = vmatprep.subr.mxu0 0.0
    %86 = vmatpush1.msra.mxu0 0.0
    %87 = vmatprep.subr.mxu0 0.0
    %88 = vmatpush1.msra.mxu0 0.0
    %89 = vmatprep.subr.mxu0 0.0
    %90 = vmatpush1.msra.mxu0 0.0
    %91 = vmatprep.subr.mxu0 0.0
    %92 = vmatpush1.msra.mxu0 0.0
    %93 = vmatprep.subr.mxu0 0.0
    %94 = vmatpush1.msra.mxu0 0.0
    %95 = vmatprep.subr.mxu0 0.0
    %96 = vmatpush1.msra.mxu0 0.0
    %97 = vmatprep.subr.mxu0 0.0
    %98 = vmatpush1.msra.mxu0 0.0
    %99 = vmatprep.subr.mxu0 0.0
    %100 = vmatpush1.msra.mxu0 0.0
    %101 = vmatprep.subr.mxu0 0.0
    %102 = vmatpush1.msra.mxu0 0.0
    %103 = vmatprep.subr.mxu0 0.0
    %104 = vmatpush1.msra.mxu0 0.0
    %105 = vmatprep.subr.mxu0 0.0
    %106 = vmatpush1.msra.mxu0 0.0
    %107 = vmatprep.subr.mxu0 0.0
    %108 = vmatpush1.msra.mxu0 0.0
    %109 = vmatprep.subr.mxu0 0.0
    %110 = vmatpush1.msra.mxu0 0.0
    %111 = vmatprep.subr.mxu0 0.0
    %112 = vmatpush1.msra.mxu0 0.0
    %113 = vmatprep.subr.mxu0 0.0
    %114 = vmatpush1.msra.mxu0 0.0
    %115 = vmatprep.subr.mxu0 0.0
    %116 = vmatpush1.msra.mxu0 0.0
    %117 = vmatprep.subr.mxu0 0.0
    %118 = vmatpush1.msra.mxu0 0.0
    %119 = vmatprep.subr.mxu0 0.0
    %120 = vmatpush1.msra.mxu0 0.0
    %121 = vmatprep.subr.mxu0 0.0
    %122 = vmatpush1.msra.mxu0 0.0
    %123 = vmatprep.subr.mxu0 0.0
    %124 = vmatpush1.msra.mxu0 0.0
    %125 = vmatprep.subr.mxu0 0.0
    %126 = vmatpush1.msra.mxu0 0.0
    %127 = vmatprep.subr.mxu0 0.0
    %128 = vmatpush1.msra.mxu0 0.0
    %129 = vmatprep.mubr.f32.mxu0 0.0
    %130 = vmatmul.mubr.f32.gmra.mrb[0].mxu0 %v63
    %v131 = vpop.f32.mrb[0].mxu0
    %v132 = vadd.f32 0.0, %v131
    %v133 = vpop.f32.mrb[0].mxu0
    %134 = vdwg.mxu0
    %v135 = vtanh.pop %v132
    %vm136 = vcmask 257024
    %v137 = vsel %vm136, %v135, 0.0
    %138 = vadd.xlane.f32.xlu0 %v137
    %v139 = vpop.xlane.xlu0 %138
    %v140 = vrcp.pop 32.0
    %v141 = vmul.f32 %v139, %v140
    %v142 = vsub.f32 %v135, %v141
    %v143 = vmul.f32 %v142, %v142
    %v144 = vsel %vm136, %v143, 0.0
    %145 = vadd.xlane.f32.xlu0 %v144
    %v146 = vpop.xlane.xlu0 %145
    %v147 = vmul.f32 %v146, %v140
    %v148 = vadd.f32 %v147, 1e-05
    %v149 = vrsqrt.pop %v148
    %v150 = vmul.f32 %v142, %v149
    %v151 = vld [vmem:[%s3] sm:$0xff]
    %vm152 = vcmask 31744
    %v154 = vsel %vm152, %v151, 0
    %vm156 = vcmask 1043456
    %v158 = vsel %vm156, %v150, 0
    %160 = vmatprep.subr.mxu0 0.0
    %161 = vmatpush1.msra.mxu0 %v158
    %162 = vmatprep.subr.mxu0 0.0
    %163 = vmatpush1.msra.mxu0 0.0
    %164 = vmatprep.subr.mxu0 0.0
    %165 = vmatpush1.msra.mxu0 0.0
    %166 = vmatprep.subr.mxu0 0.0
    %167 = vmatpush1.msra.mxu0 0.0
    %168 = vmatprep.subr.mxu0 0.0
    %169 = vmatpush1.msra.mxu0 0.0
    %170 = vmatprep.subr.mxu0 0.0
    %171 = vmatpush1.msra.mxu0 0.0
    %172 = vmatprep.subr.mxu0 0.0
    %173 = vmatpush1.msra.mxu0 0.0
    %174 = vmatprep.subr.mxu0 0.0
    %175 = vmatpush1.msra.mxu0 0.0
    %176 = vmatprep.subr.mxu0 0.0
    %177 = vmatpush1.msra.mxu0 0.0
    %178 = vmatprep.subr.mxu0 0.0
    %179 = vmatpush1.msra.mxu0 0.0
    %180 = vmatprep.subr.mxu0 0.0
    %181 = vmatpush1.msra.mxu0 0.0
    %182 = vmatprep.subr.mxu0 0.0
    %183 = vmatpush1.msra.mxu0 0.0
    %184 = vmatprep.subr.mxu0 0.0
    %185 = vmatpush1.msra.mxu0 0.0
    %186 = vmatprep.subr.mxu0 0.0
    %187 = vmatpush1.msra.mxu0 0.0
    %188 = vmatprep.subr.mxu0 0.0
    %189 = vmatpush1.msra.mxu0 0.0
    %190 = vmatprep.subr.mxu0 0.0
    %191 = vmatpush1.msra.mxu0 0.0
    %192 = vmatprep.subr.mxu0 0.0
    %193 = vmatpush1.msra.mxu0 0.0
    %194 = vmatprep.subr.mxu0 0.0
    %195 = vmatpush1.msra.mxu0 0.0
    %196 = vmatprep.subr.mxu0 0.0
    %197 = vmatpush1.msra.mxu0 0.0
    %198 = vmatprep.subr.mxu0 0.0
    %199 = vmatpush1.msra.mxu0 0.0
    %200 = vmatprep.subr.mxu0 0.0
    %201 = vmatpush1.msra.mxu0 0.0
    %202 = vmatprep.subr.mxu0 0.0
    %203 = vmatpush1.msra.mxu0 0.0
    %204 = vmatprep.subr.mxu0 0.0
    %205 = vmatpush1.msra.mxu0 0.0
    %206 = vmatprep.subr.mxu0 0.0
    %207 = vmatpush1.msra.mxu0 0.0
    %208 = vmatprep.subr.mxu0 0.0
    %209 = vmatpush1.msra.mxu0 0.0
    %210 = vmatprep.subr.mxu0 0.0
    %211 = vmatpush1.msra.mxu0 0.0
    %212 = vmatprep.subr.mxu0 0.0
    %213 = vmatpush1.msra.mxu0 0.0
    %214 = vmatprep.subr.mxu0 0.0
    %215 = vmatpush1.msra.mxu0 0.0
    %216 = vmatprep.subr.mxu0 0.0
    %217 = vmatpush1.msra.mxu0 0.0
    %218 = vmatprep.subr.mxu0 0.0
    %219 = vmatpush1.msra.mxu0 0.0
    %220 = vmatprep.subr.mxu0 0.0
    %221 = vmatpush1.msra.mxu0 0.0
    %222 = vmatprep.subr.mxu0 0.0
    %223 = vmatpush1.msra.mxu0 0.0
    %224 = vmatprep.mubr.f32.mxu0 0.0
    %225 = vmatmul.mubr.f32.gmra.mrb[0].mxu0 %v154
    %v226 = vpop.f32.mrb[0].mxu0
    %v227 = vadd.f32 0.0, %v226
    %v228 = vpop.f32.mrb[0].mxu0
    %229 = vdwg.mxu0
    %v230 = vld [vmem:[%s4] sm:$0xff]
    %v231 = vld [vmem:[%s4 + $0x8] sm:$0xff]
    %v232 = vld [vmem:[%s4 + $0x10] sm:$0xff]
    %v233 = vld [vmem:[%s4 + $0x18] sm:$0xff]
    %vm234 = vcmask 261120
    %v236 = vsel %vm234, %v227, 0
    %238 = vmatprep.subr.mxu0 0.0
    %239 = vmatpush1.msra.mxu0 %v230
    %240 = vmatprep.subr.mxu0 0.0
    %241 = vmatpush1.msra.mxu0 %v231
    %242 = vmatprep.subr.mxu0 0.0
    %243 = vmatpush1.msra.mxu0 %v232
    %244 = vmatprep.subr.mxu0 0.0
    %245 = vmatpush1.msra.mxu0 %v233
    %246 = vmatprep.subr.mxu0 0.0
    %247 = vmatpush1.msra.mxu0 0.0
    %248 = vmatprep.subr.mxu0 0.0
    %249 = vmatpush1.msra.mxu0 0.0
    %250 = vmatprep.subr.mxu0 0.0
    %251 = vmatpush1.msra.mxu0 0.0
    %252 = vmatprep.subr.mxu0 0.0
    %253 = vmatpush1.msra.mxu0 0.0
    %254 = vmatprep.subr.mxu0 0.0
    %255 = vmatpush1.msra.mxu0 0.0
    %256 = vmatprep.subr.mxu0 0.0
    %257 = vmatpush1.msra.mxu0 0.0
    %258 = vmatprep.subr.mxu0 0.0
    %259 = vmatpush1.msra.mxu0 0.0
    %260 = vmatprep.subr.mxu0 0.0
    %261 = vmatpush1.msra.mxu0 0.0
    %262 = vmatprep.subr.mxu0 0.0
    %263 = vmatpush1.msra.mxu0 0.0
    %264 = vmatprep.subr.mxu0 0.0
    %265 = vmatpush1.msra.mxu0 0.0
    %266 = vmatprep.subr.mxu0 0.0
    %267 = vmatpush1.msra.mxu0 0.0
    %268 = vmatprep.subr.mxu0 0.0
    %269 = vmatpush1.msra.mxu0 0.0
    %270 = vmatprep.subr.mxu0 0.0
    %271 = vmatpush1.msra.mxu0 0.0
    %272 = vmatprep.subr.mxu0 0.0
    %273 = vmatpush1.msra.mxu0 0.0
    %274 = vmatprep.subr.mxu0 0.0
    %275 = vmatpush1.msra.mxu0 0.0
    %276 = vmatprep.subr.mxu0 0.0
    %277 = vmatpush1.msra.mxu0 0.0
    %278 = vmatprep.subr.mxu0 0.0
    %279 = vmatpush1.msra.mxu0 0.0
    %280 = vmatprep.subr.mxu0 0.0
    %281 = vmatpush1.msra.mxu0 0.0
    %282 = vmatprep.subr.mxu0 0.0
    %283 = vmatpush1.msra.mxu0 0.0
    %284 = vmatprep.subr.mxu0 0.0
    %285 = vmatpush1.msra.mxu0 0.0
    %286 = vmatprep.subr.mxu0 0.0
    %287 = vmatpush1.msra.mxu0 0.0
    %288 = vmatprep.subr.mxu0 0.0
    %289 = vmatpush1.msra.mxu0 0.0
    %290 = vmatprep.subr.mxu0 0.0
    %291 = vmatpush1.msra.mxu0 0.0
    %292 = vmatprep.subr.mxu0 0.0
    %293 = vmatpush1.msra.mxu0 0.0
    %294 = vmatprep.subr.mxu0 0.0
    %295 = vmatpush1.msra.mxu0 0.0
    %296 = vmatprep.subr.mxu0 0.0
    %297 = vmatpush1.msra.mxu0 0.0
    %298 = vmatprep.subr.mxu0 0.0
    %299 = vmatpush1.msra.mxu0 0.0
    %300 = vmatprep.subr.mxu0 0.0
    %301 = vmatpush1.msra.mxu0 0.0
    %302 = vmatprep.mubr.f32.mxu0 0.0
    %303 = vmatmul.mubr.f32.gmra.mrb[0].mxu0 %v236
    %v304 = vpop.f32.mrb[0].mxu0
    %v305 = vadd.f32 0.0, %v304
    %v306 = vpop.f32.mrb[0].mxu0
    %307 = vdwg.mxu0
    %v308 = vtanh.pop %v305
    %vm309 = vcmask 130048
    %v310 = vsel %vm309, %v308, 0.0
    %311 = vadd.xlane.f32.xlu0 %v310
    %v312 = vpop.xlane.xlu0 %311
    %v313 = vrcp.pop 16.0
    %v314 = vmul.f32 %v312, %v313
    %v315 = vsub.f32 %v308, %v314
    %v316 = vmul.f32 %v315, %v315
    %v317 = vsel %vm309, %v316, 0.0
    %318 = vadd.xlane.f32.xlu0 %v317
    %v319 = vpop.xlane.xlu0 %318
    %v320 = vmul.f32 %v319, %v313
    %v321 = vadd.f32 %v320, 1e-05
    %v322 = vrsqrt.pop %v321
    %v323 = vmul.f32 %v315, %v322
    %v324 = vld [vmem:[%s5] sm:$0xf]
    %vm325 = vcmask 64512
    %v327 = vsel %vm325, %v324, 0
    %329 = vmatprep.subr.mxu0 0.0
    %330 = vmatpush1.msra.mxu0 %v323
    %331 = vmatprep.subr.mxu0 0.0
    %332 = vmatpush1.msra.mxu0 0.0
    %333 = vmatprep.subr.mxu0 0.0
    %334 = vmatpush1.msra.mxu0 0.0
    %335 = vmatprep.subr.mxu0 0.0
    %336 = vmatpush1.msra.mxu0 0.0
    %337 = vmatprep.subr.mxu0 0.0
    %338 = vmatpush1.msra.mxu0 0.0
    %339 = vmatprep.subr.mxu0 0.0
    %340 = vmatpush1.msra.mxu0 0.0
    %341 = vmatprep.subr.mxu0 0.0
    %342 = vmatpush1.msra.mxu0 0.0
    %343 = vmatprep.subr.mxu0 0.0
    %344 = vmatpush1.msra.mxu0 0.0
    %345 = vmatprep.subr.mxu0 0.0
    %346 = vmatpush1.msra.mxu0 0.0
    %347 = vmatprep.subr.mxu0 0.0
    %348 = vmatpush1.msra.mxu0 0.0
    %349 = vmatprep.subr.mxu0 0.0
    %350 = vmatpush1.msra.mxu0 0.0
    %351 = vmatprep.subr.mxu0 0.0
    %352 = vmatpush1.msra.mxu0 0.0
    %353 = vmatprep.subr.mxu0 0.0
    %354 = vmatpush1.msra.mxu0 0.0
    %355 = vmatprep.subr.mxu0 0.0
    %356 = vmatpush1.msra.mxu0 0.0
    %357 = vmatprep.subr.mxu0 0.0
    %358 = vmatpush1.msra.mxu0 0.0
    %359 = vmatprep.subr.mxu0 0.0
    %360 = vmatpush1.msra.mxu0 0.0
    %361 = vmatprep.subr.mxu0 0.0
    %362 = vmatpush1.msra.mxu0 0.0
    %363 = vmatprep.subr.mxu0 0.0
    %364 = vmatpush1.msra.mxu0 0.0
    %365 = vmatprep.subr.mxu0 0.0
    %366 = vmatpush1.msra.mxu0 0.0
    %367 = vmatprep.subr.mxu0 0.0
    %368 = vmatpush1.msra.mxu0 0.0
    %369 = vmatprep.subr.mxu0 0.0
    %370 = vmatpush1.msra.mxu0 0.0
    %371 = vmatprep.subr.mxu0 0.0
    %372 = vmatpush1.msra.mxu0 0.0
    %373 = vmatprep.subr.mxu0 0.0
    %374 = vmatpush1.msra.mxu0 0.0
    %375 = vmatprep.subr.mxu0 0.0
    %376 = vmatpush1.msra.mxu0 0.0
    %377 = vmatprep.subr.mxu0 0.0
    %378 = vmatpush1.msra.mxu0 0.0
    %379 = vmatprep.subr.mxu0 0.0
    %380 = vmatpush1.msra.mxu0 0.0
    %381 = vmatprep.subr.mxu0 0.0
    %382 = vmatpush1.msra.mxu0 0.0
    %383 = vmatprep.subr.mxu0 0.0
    %384 = vmatpush1.msra.mxu0 0.0
    %385 = vmatprep.subr.mxu0 0.0
    %386 = vmatpush1.msra.mxu0 0.0
    %387 = vmatprep.subr.mxu0 0.0
    %388 = vmatpush1.msra.mxu0 0.0
    %389 = vmatprep.subr.mxu0 0.0
    %390 = vmatpush1.msra.mxu0 0.0
    %391 = vmatprep.subr.mxu0 0.0
    %392 = vmatpush1.msra.mxu0 0.0
    %393 = vmatprep.mubr.f32.mxu0 0.0
    %394 = vmatmul.mubr.f32.gmra.mrb[0].mxu0 %v327
    %v395 = vpop.f32.mrb[0].mxu0
    %v396 = vadd.f32 0.0, %v395
    %v397 = vpop.f32.mrb[0].mxu0
    %398 = vdwg.mxu0
    %v399 = vld [vmem:[%s6] sm:$0xff]
    %v400 = vld [vmem:[%s6 + $0x8] sm:$0xff]
    %v402 = vsel %vm309, %v396, 0
    %404 = vmatprep.subr.mxu0 0.0
    %405 = vmatpush1.msra.mxu0 %v399
    %406 = vmatprep.subr.mxu0 0.0
    %407 = vmatpush1.msra.mxu0 %v400
    %408 = vmatprep.subr.mxu0 0.0
    %409 = vmatpush1.msra.mxu0 0.0
    %410 = vmatprep.subr.mxu0 0.0
    %411 = vmatpush1.msra.mxu0 0.0
    %412 = vmatprep.subr.mxu0 0.0
    %413 = vmatpush1.msra.mxu0 0.0
    %414 = vmatprep.subr.mxu0 0.0
    %415 = vmatpush1.msra.mxu0 0.0
    %416 = vmatprep.subr.mxu0 0.0
    %417 = vmatpush1.msra.mxu0 0.0
    %418 = vmatprep.subr.mxu0 0.0
    %419 = vmatpush1.msra.mxu0 0.0
    %420 = vmatprep.subr.mxu0 0.0
    %421 = vmatpush1.msra.mxu0 0.0
    %422 = vmatprep.subr.mxu0 0.0
    %423 = vmatpush1.msra.mxu0 0.0
    %424 = vmatprep.subr.mxu0 0.0
    %425 = vmatpush1.msra.mxu0 0.0
    %426 = vmatprep.subr.mxu0 0.0
    %427 = vmatpush1.msra.mxu0 0.0
    %428 = vmatprep.subr.mxu0 0.0
    %429 = vmatpush1.msra.mxu0 0.0
    %430 = vmatprep.subr.mxu0 0.0
    %431 = vmatpush1.msra.mxu0 0.0
    %432 = vmatprep.subr.mxu0 0.0
    %433 = vmatpush1.msra.mxu0 0.0
    %434 = vmatprep.subr.mxu0 0.0
    %435 = vmatpush1.msra.mxu0 0.0
    %436 = vmatprep.subr.mxu0 0.0
    %437 = vmatpush1.msra.mxu0 0.0
    %438 = vmatprep.subr.mxu0 0.0
    %439 = vmatpush1.msra.mxu0 0.0
    %440 = vmatprep.subr.mxu0 0.0
    %441 = vmatpush1.msra.mxu0 0.0
    %442 = vmatprep.subr.mxu0 0.0
    %443 = vmatpush1.msra.mxu0 0.0
    %444 = vmatprep.subr.mxu0 0.0
    %445 = vmatpush1.msra.mxu0 0.0
    %446 = vmatprep.subr.mxu0 0.0
    %447 = vmatpush1.msra.mxu0 0.0
    %448 = vmatprep.subr.mxu0 0.0
    %449 = vmatpush1.msra.mxu0 0.0
    %450 = vmatprep.subr.mxu0 0.0
    %451 = vmatpush1.msra.mxu0 0.0
    %452 = vmatprep.subr.mxu0 0.0
    %453 = vmatpush1.msra.mxu0 0.0
    %454 = vmatprep.subr.mxu0 0.0
    %455 = vmatpush1.msra.mxu0 0.0
    %456 = vmatprep.subr.mxu0 0.0
    %457 = vmatpush1.msra.mxu0 0.0
    %458 = vmatprep.subr.mxu0 0.0
    %459 = vmatpush1.msra.mxu0 0.0
    %460 = vmatprep.subr.mxu0 0.0
    %461 = vmatpush1.msra.mxu0 0.0
    %462 = vmatprep.subr.mxu0 0.0
    %463 = vmatpush1.msra.mxu0 0.0
    %464 = vmatprep.subr.mxu0 0.0
    %465 = vmatpush1.msra.mxu0 0.0
    %466 = vmatprep.subr.mxu0 0.0
    %467 = vmatpush1.msra.mxu0 0.0
    %468 = vmatprep.mubr.f32.mxu0 0.0
    %469 = vmatmul.mubr.f32.gmra.mrb[0].mxu0 %v402
    %v470 = vpop.f32.mrb[0].mxu0
    %v471 = vadd.f32 0.0, %v470
    %v472 = vpop.f32.mrb[0].mxu0
    %473 = vdwg.mxu0
    %v474 = vtanh.pop %v471
    %v475 = vsel %vm136, %v474, 0.0
    %476 = vadd.xlane.f32.xlu0 %v475
    %v477 = vpop.xlane.xlu0 %476
    %v478 = vmul.f32 %v477, %v140
    %v479 = vsub.f32 %v474, %v478
    %v480 = vmul.f32 %v479, %v479
    %v481 = vsel %vm136, %v480, 0.0
    %482 = vadd.xlane.f32.xlu0 %v481
    %v483 = vpop.xlane.xlu0 %482
    %v484 = vmul.f32 %v483, %v140
    %v485 = vadd.f32 %v484, 1e-05
    %v486 = vrsqrt.pop %v485
    %v487 = vmul.f32 %v479, %v486
    %v488 = vld [vmem:[%s7] sm:$0xf]
    %v490 = vsel %vm152, %v488, 0
    %v493 = vsel %vm156, %v487, 0
    %495 = vmatprep.subr.mxu0 0.0
    %496 = vmatpush1.msra.mxu0 %v493
    %497 = vmatprep.subr.mxu0 0.0
    %498 = vmatpush1.msra.mxu0 0.0
    %499 = vmatprep.subr.mxu0 0.0
    %500 = vmatpush1.msra.mxu0 0.0
    %501 = vmatprep.subr.mxu0 0.0
    %502 = vmatpush1.msra.mxu0 0.0
    %503 = vmatprep.subr.mxu0 0.0
    %504 = vmatpush1.msra.mxu0 0.0
    %505 = vmatprep.subr.mxu0 0.0
    %506 = vmatpush1.msra.mxu0 0.0
    %507 = vmatprep.subr.mxu0 0.0
    %508 = vmatpush1.msra.mxu0 0.0
    %509 = vmatprep.subr.mxu0 0.0
    %510 = vmatpush1.msra.mxu0 0.0
    %511 = vmatprep.subr.mxu0 0.0
    %512 = vmatpush1.msra.mxu0 0.0
    %513 = vmatprep.subr.mxu0 0.0
    %514 = vmatpush1.msra.mxu0 0.0
    %515 = vmatprep.subr.mxu0 0.0
    %516 = vmatpush1.msra.mxu0 0.0
    %517 = vmatprep.subr.mxu0 0.0
    %518 = vmatpush1.msra.mxu0 0.0
    %519 = vmatprep.subr.mxu0 0.0
    %520 = vmatpush1.msra.mxu0 0.0
    %521 = vmatprep.subr.mxu0 0.0
    %522 = vmatpush1.msra.mxu0 0.0
    %523 = vmatprep.subr.mxu0 0.0
    %524 = vmatpush1.msra.mxu0 0.0
    %525 = vmatprep.subr.mxu0 0.0
    %526 = vmatpush1.msra.mxu0 0.0
    %527 = vmatprep.subr.mxu0 0.0
    %528 = vmatpush1.msra.mxu0 0.0
    %529 = vmatprep.subr.mxu0 0.0
    %530 = vmatpush1.msra.mxu0 0.0
    %531 = vmatprep.subr.mxu0 0.0
    %532 = vmatpush1.msra.mxu0 0.0
    %533 = vmatprep.subr.mxu0 0.0
    %534 = vmatpush1.msra.mxu0 0.0
    %535 = vmatprep.subr.mxu0 0.0
    %536 = vmatpush1.msra.mxu0 0.0
    %537 = vmatprep.subr.mxu0 0.0
    %538 = vmatpush1.msra.mxu0 0.0
    %539 = vmatprep.subr.mxu0 0.0
    %540 = vmatpush1.msra.mxu0 0.0
    %541 = vmatprep.subr.mxu0 0.0
    %542 = vmatpush1.msra.mxu0 0.0
    %543 = vmatprep.subr.mxu0 0.0
    %544 = vmatpush1.msra.mxu0 0.0
    %545 = vmatprep.subr.mxu0 0.0
    %546 = vmatpush1.msra.mxu0 0.0
    %547 = vmatprep.subr.mxu0 0.0
    %548 = vmatpush1.msra.mxu0 0.0
    %549 = vmatprep.subr.mxu0 0.0
    %550 = vmatpush1.msra.mxu0 0.0
    %551 = vmatprep.subr.mxu0 0.0
    %552 = vmatpush1.msra.mxu0 0.0
    %553 = vmatprep.subr.mxu0 0.0
    %554 = vmatpush1.msra.mxu0 0.0
    %555 = vmatprep.subr.mxu0 0.0
    %556 = vmatpush1.msra.mxu0 0.0
    %557 = vmatprep.subr.mxu0 0.0
    %558 = vmatpush1.msra.mxu0 0.0
    %559 = vmatprep.mubr.f32.mxu0 0.0
    %560 = vmatmul.mubr.f32.gmra.mrb[0].mxu0 %v490
    %v561 = vpop.f32.mrb[0].mxu0
    %v562 = vadd.f32 0.0, %v561
    %v563 = vpop.f32.mrb[0].mxu0
    %564 = vdwg.mxu0
    %v565 = vld [vmem:[%s8] sm:$0xff]
    %v566 = vld [vmem:[%s8 + $0x8] sm:$0xff]
    %v567 = vld [vmem:[%s8 + $0x10] sm:$0xff]
    %v568 = vld [vmem:[%s8 + $0x18] sm:$0xff]
    %v570 = vsel %vm234, %v562, 0
    %572 = vmatprep.subr.mxu0 0.0
    %573 = vmatpush1.msra.mxu0 %v565
    %574 = vmatprep.subr.mxu0 0.0
    %575 = vmatpush1.msra.mxu0 %v566
    %576 = vmatprep.subr.mxu0 0.0
    %577 = vmatpush1.msra.mxu0 %v567
    %578 = vmatprep.subr.mxu0 0.0
    %579 = vmatpush1.msra.mxu0 %v568
    %580 = vmatprep.subr.mxu0 0.0
    %581 = vmatpush1.msra.mxu0 0.0
    %582 = vmatprep.subr.mxu0 0.0
    %583 = vmatpush1.msra.mxu0 0.0
    %584 = vmatprep.subr.mxu0 0.0
    %585 = vmatpush1.msra.mxu0 0.0
    %586 = vmatprep.subr.mxu0 0.0
    %587 = vmatpush1.msra.mxu0 0.0
    %588 = vmatprep.subr.mxu0 0.0
    %589 = vmatpush1.msra.mxu0 0.0
    %590 = vmatprep.subr.mxu0 0.0
    %591 = vmatpush1.msra.mxu0 0.0
    %592 = vmatprep.subr.mxu0 0.0
    %593 = vmatpush1.msra.mxu0 0.0
    %594 = vmatprep.subr.mxu0 0.0
    %595 = vmatpush1.msra.mxu0 0.0
    %596 = vmatprep.subr.mxu0 0.0
    %597 = vmatpush1.msra.mxu0 0.0
    %598 = vmatprep.subr.mxu0 0.0
    %599 = vmatpush1.msra.mxu0 0.0
    %600 = vmatprep.subr.mxu0 0.0
    %601 = vmatpush1.msra.mxu0 0.0
    %602 = vmatprep.subr.mxu0 0.0
    %603 = vmatpush1.msra.mxu0 0.0
    %604 = vmatprep.subr.mxu0 0.0
    %605 = vmatpush1.msra.mxu0 0.0
    %606 = vmatprep.subr.mxu0 0.0
    %607 = vmatpush1.msra.mxu0 0.0
    %608 = vmatprep.subr.mxu0 0.0
    %609 = vmatpush1.msra.mxu0 0.0
    %610 = vmatprep.subr.mxu0 0.0
    %611 = vmatpush1.msra.mxu0 0.0
    %612 = vmatprep.subr.mxu0 0.0
    %613 = vmatpush1.msra.mxu0 0.0
    %614 = vmatprep.subr.mxu0 0.0
    %615 = vmatpush1.msra.mxu0 0.0
    %616 = vmatprep.subr.mxu0 0.0
    %617 = vmatpush1.msra.mxu0 0.0
    %618 = vmatprep.subr.mxu0 0.0
    %619 = vmatpush1.msra.mxu0 0.0
    %620 = vmatprep.subr.mxu0 0.0
    %621 = vmatpush1.msra.mxu0 0.0
    %622 = vmatprep.subr.mxu0 0.0
    %623 = vmatpush1.msra.mxu0 0.0
    %624 = vmatprep.subr.mxu0 0.0
    %625 = vmatpush1.msra.mxu0 0.0
    %626 = vmatprep.subr.mxu0 0.0
    %627 = vmatpush1.msra.mxu0 0.0
    %628 = vmatprep.subr.mxu0 0.0
    %629 = vmatpush1.msra.mxu0 0.0
    %630 = vmatprep.subr.mxu0 0.0
    %631 = vmatpush1.msra.mxu0 0.0
    %632 = vmatprep.subr.mxu0 0.0
    %633 = vmatpush1.msra.mxu0 0.0
    %634 = vmatprep.subr.mxu0 0.0
    %635 = vmatpush1.msra.mxu0 0.0
    %636 = vmatprep.mubr.f32.mxu0 0.0
    %637 = vmatmul.mubr.f32.gmra.mrb[0].mxu0 %v570
    %v638 = vpop.f32.mrb[0].mxu0
    %v639 = vadd.f32 0.0, %v638
    %v640 = vpop.f32.mrb[0].mxu0
    %641 = vdwg.mxu0
    %v642 = vtanh.pop %v639
    %vm643 = vcmask 519168
    %v644 = vsel %vm643, %v642, 0.0
    %645 = vadd.xlane.f32.xlu0 %v644
    %v646 = vpop.xlane.xlu0 %645
    %v647 = vrcp.pop 64.0
    %v648 = vmul.f32 %v646, %v647
    %v649 = vsub.f32 %v642, %v648
    %v650 = vmul.f32 %v649, %v649
    %v651 = vsel %vm643, %v650, 0.0
    %652 = vadd.xlane.f32.xlu0 %v651
    %v653 = vpop.xlane.xlu0 %652
    %v654 = vmul.f32 %v653, %v647
    %v655 = vadd.f32 %v654, 1e-05
    %v656 = vrsqrt.pop %v655
    %v657 = vmul.f32 %v649, %v656
    %v658 = vld [vmem:[%s9] sm:$0xf]
    %v660 = vsel %vm152, %v658, 0
    %v663 = vsel %vm156, %v657, 0
    %665 = vmatprep.subr.mxu0 0.0
    %666 = vmatpush1.msra.mxu0 %v663
    %667 = vmatprep.subr.mxu0 0.0
    %668 = vmatpush1.msra.mxu0 0.0
    %669 = vmatprep.subr.mxu0 0.0
    %670 = vmatpush1.msra.mxu0 0.0
    %671 = vmatprep.subr.mxu0 0.0
    %672 = vmatpush1.msra.mxu0 0.0
    %673 = vmatprep.subr.mxu0 0.0
    %674 = vmatpush1.msra.mxu0 0.0
    %675 = vmatprep.subr.mxu0 0.0
    %676 = vmatpush1.msra.mxu0 0.0
    %677 = vmatprep.subr.mxu0 0.0
    %678 = vmatpush1.msra.mxu0 0.0
    %679 = vmatprep.subr.mxu0 0.0
    %680 = vmatpush1.msra.mxu0 0.0
    %681 = vmatprep.subr.mxu0 0.0
    %682 = vmatpush1.msra.mxu0 0.0
    %683 = vmatprep.subr.mxu0 0.0
    %684 = vmatpush1.msra.mxu0 0.0
    %685 = vmatprep.subr.mxu0 0.0
    %686 = vmatpush1.msra.mxu0 0.0
    %687 = vmatprep.subr.mxu0 0.0
    %688 = vmatpush1.msra.mxu0 0.0
    %689 = vmatprep.subr.mxu0 0.0
    %690 = vmatpush1.msra.mxu0 0.0
    %691 = vmatprep.subr.mxu0 0.0
    %692 = vmatpush1.msra.mxu0 0.0
    %693 = vmatprep.subr.mxu0 0.0
    %694 = vmatpush1.msra.mxu0 0.0
    %695 = vmatprep.subr.mxu0 0.0
    %696 = vmatpush1.msra.mxu0 0.0
    %697 = vmatprep.subr.mxu0 0.0
    %698 = vmatpush1.msra.mxu0 0.0
    %699 = vmatprep.subr.mxu0 0.0
    %700 = vmatpush1.msra.mxu0 0.0
    %701 = vmatprep.subr.mxu0 0.0
    %702 = vmatpush1.msra.mxu0 0.0
    %703 = vmatprep.subr.mxu0 0.0
    %704 = vmatpush1.msra.mxu0 0.0
    %705 = vmatprep.subr.mxu0 0.0
    %706 = vmatpush1.msra.mxu0 0.0
    %707 = vmatprep.subr.mxu0 0.0
    %708 = vmatpush1.msra.mxu0 0.0
    %709 = vmatprep.subr.mxu0 0.0
    %710 = vmatpush1.msra.mxu0 0.0
    %711 = vmatprep.subr.mxu0 0.0
    %712 = vmatpush1.msra.mxu0 0.0
    %713 = vmatprep.subr.mxu0 0.0
    %714 = vmatpush1.msra.mxu0 0.0
    %715 = vmatprep.subr.mxu0 0.0
    %716 = vmatpush1.msra.mxu0 0.0
    %717 = vmatprep.subr.mxu0 0.0
    %718 = vmatpush1.msra.mxu0 0.0
    %719 = vmatprep.subr.mxu0 0.0
    %720 = vmatpush1.msra.mxu0 0.0
    %721 = vmatprep.subr.mxu0 0.0
    %722 = vmatpush1.msra.mxu0 0.0
    %723 = vmatprep.subr.mxu0 0.0
    %724 = vmatpush1.msra.mxu0 0.0
    %725 = vmatprep.subr.mxu0 0.0
    %726 = vmatpush1.msra.mxu0 0.0
    %727 = vmatprep.subr.mxu0 0.0
    %728 = vmatpush1.msra.mxu0 0.0
    %729 = vmatprep.mubr.f32.mxu0 0.0
    %730 = vmatmul.mubr.f32.gmra.mrb[0].mxu0 %v660
    %v731 = vpop.f32.mrb[0].mxu0
    %v732 = vadd.f32 0.0, %v731
    %v733 = vpop.f32.mrb[0].mxu0
    %734 = vdwg.mxu0
    %v735 = vtanh.pop %v732
    %v736 = vsel %vm643, %v735, 0.0
    %737 = vadd.xlane.f32.xlu0 %v736
    %v738 = vpop.xlane.xlu0 %737
    %v739 = vmul.f32 %v738, %v647
    %v740 = vsub.f32 %v735, %v739
    %v741 = vmul.f32 %v740, %v740
    %v742 = vsel %vm643, %v741, 0.0
    %743 = vadd.xlane.f32.xlu0 %v742
    %v744 = vpop.xlane.xlu0 %743
    %v745 = vmul.f32 %v744, %v647
    %v746 = vadd.f32 %v745, 1e-05
    %v747 = vrsqrt.pop %v746
    %v748 = vmul.f32 %v740, %v747
    %v749 = vld [vmem:[%s10] sm:$0x1]
    %v751 = vsel %vm152, %v749, 0
    %v754 = vsel %vm156, %v748, 0
    %756 = vmatprep.subr.mxu0 0.0
    %757 = vmatpush1.msra.mxu0 %v754
    %758 = vmatprep.subr.mxu0 0.0
    %759 = vmatpush1.msra.mxu0 0.0
    %760 = vmatprep.subr.mxu0 0.0
    %761 = vmatpush1.msra.mxu0 0.0
    %762 = vmatprep.subr.mxu0 0.0
    %763 = vmatpush1.msra.mxu0 0.0
    %764 = vmatprep.subr.mxu0 0.0
    %765 = vmatpush1.msra.mxu0 0.0
    %766 = vmatprep.subr.mxu0 0.0
    %767 = vmatpush1.msra.mxu0 0.0
    %768 = vmatprep.subr.mxu0 0.0
    %769 = vmatpush1.msra.mxu0 0.0
    %770 = vmatprep.subr.mxu0 0.0
    %771 = vmatpush1.msra.mxu0 0.0
    %772 = vmatprep.subr.mxu0 0.0
    %773 = vmatpush1.msra.mxu0 0.0
    %774 = vmatprep.subr.mxu0 0.0
    %775 = vmatpush1.msra.mxu0 0.0
    %776 = vmatprep.subr.mxu0 0.0
    %777 = vmatpush1.msra.mxu0 0.0
    %778 = vmatprep.subr.mxu0 0.0
    %779 = vmatpush1.msra.mxu0 0.0
    %780 = vmatprep.subr.mxu0 0.0
    %781 = vmatpush1.msra.mxu0 0.0
    %782 = vmatprep.subr.mxu0 0.0
    %783 = vmatpush1.msra.mxu0 0.0
    %784 = vmatprep.subr.mxu0 0.0
    %785 = vmatpush1.msra.mxu0 0.0
    %786 = vmatprep.subr.mxu0 0.0
    %787 = vmatpush1.msra.mxu0 0.0
    %788 = vmatprep.subr.mxu0 0.0
    %789 = vmatpush1.msra.mxu0 0.0
    %790 = vmatprep.subr.mxu0 0.0
    %791 = vmatpush1.msra.mxu0 0.0
    %792 = vmatprep.subr.mxu0 0.0
    %793 = vmatpush1.msra.mxu0 0.0
    %794 = vmatprep.subr.mxu0 0.0
    %795 = vmatpush1.msra.mxu0 0.0
    %796 = vmatprep.subr.mxu0 0.0
    %797 = vmatpush1.msra.mxu0 0.0
    %798 = vmatprep.subr.mxu0 0.0
    %799 = vmatpush1.msra.mxu0 0.0
    %800 = vmatprep.subr.mxu0 0.0
    %801 = vmatpush1.msra.mxu0 0.0
    %802 = vmatprep.subr.mxu0 0.0
    %803 = vmatpush1.msra.mxu0 0.0
    %804 = vmatprep.subr.mxu0 0.0
    %805 = vmatpush1.msra.mxu0 0.0
    %806 = vmatprep.subr.mxu0 0.0
    %807 = vmatpush1.msra.mxu0 0.0
    %808 = vmatprep.subr.mxu0 0.0
    %809 = vmatpush1.msra.mxu0 0.0
    %810 = vmatprep.subr.mxu0 0.0
    %811 = vmatpush1.msra.mxu0 0.0
    %812 = vmatprep.subr.mxu0 0.0
    %813 = vmatpush1.msra.mxu0 0.0
    %814 = vmatprep.subr.mxu0 0.0
    %815 = vmatpush1.msra.mxu0 0.0
    %816 = vmatprep.subr.mxu0 0.0
    %817 = vmatpush1.msra.mxu0 0.0
    %818 = vmatprep.subr.mxu0 0.0
    %819 = vmatpush1.msra.mxu0 0.0
    %820 = vmatprep.mubr.f32.mxu0 0.0
    %821 = vmatmul.mubr.f32.gmra.mrb[0].mxu0 %v751
    %v822 = vpop.f32.mrb[0].mxu0
    %v823 = vadd.f32 0.0, %v822
    %v824 = vpop.f32.mrb[0].mxu0
    %825 = vdwg.mxu0
    %v826 = vtanh.pop %v823
    %vm827 = vcmask 516096
    %828 = vst.msk [vmem:[#allocation2] sm:$0x1] %vm827, %v826
    // Predicated region
    $region46: #{tpu_custom_call.1} parent=1 // pred_check
      _
    $region47: #{tpu_custom_call.1} parent=1 // pred_check_branch
      %830 = sbr.rel (0) target = $region49
    $region48: #{tpu_custom_call.1} parent=1 // pred_region
      %s832 = ssub.s32 16, 16
      %833 = vsyncadd [#allocation3], %s832
      %s835 = sshll.u32 [#allocation2], 4
      %s836 = int_to_ptr.vmem [resolvable:$true] %s835
      %838 = dma.vmem_to_hbm [thread:$0]  %s836, 16, %s11, [#allocation3]
    $region49: #{tpu_custom_call.1} parent=1 // pred_fallthru
      _
    // Predicated region
    $region50: #{tpu_custom_call.1} parent=1 // pred_check
      _
    $region51: #{tpu_custom_call.1} parent=1 // pred_check_branch
      %840 = sbr.rel (0) target = $region53
    $region52: #{tpu_custom_call.1} parent=1 // pred_region
      %841 = dma.done [#allocation3], 16
    $region53: #{tpu_custom_call.1} parent=1 // pred_fallthru
      _
    %842 = vsyncpa [#allocation3], 1

</llo_original>
